<compile_context>
chip_gen: v5e
topology: v5e:2x2
jax: 0.10.0
libtpu: 0.0.40
codegen_flags: <defaults>
</compile_context>

<pallas_src>
import functools

import jax
import jax.numpy as jnp
from jax.experimental import pallas as pl
from jax.experimental.pallas import tpu as pltpu

HIDDEN = 64
BATCH_TILE = 2048        # rows per grid step for very large batches
SMALL_BATCH_MAX = 8192   # up to this many rows -> grid-less, fully resident


def _round_up(n: int, m: int) -> int:
    return ((n + m - 1) // m) * m


def qnet_kernel(x_ref, w1_ref, b1_ref, w2_ref, b2_ref, o_ref):
    # fc1 on the MXU, explicit f32 accumulation (inputs may be f32 or bf16).
    h = jnp.dot(x_ref[...], w1_ref[...], preferred_element_type=jnp.float32)
    # Bias-add + ReLU stay f32 on the VPU (v5e has no bf16 VPU).
    h = jnp.maximum(h + b1_ref[...], 0.0)
    # fc2: cast h to the streaming dtype so both MXU operands match.
    y = jnp.dot(h.astype(w2_ref.dtype), w2_ref[...],
                preferred_element_type=jnp.float32)
    o_ref[...] = (y + b2_ref[...]).astype(o_ref.dtype)


def _qnet_call_small(x, w1, b1, w2, b2, out_dtype):
    """Whole problem resident in VMEM: no grid, no pipeline machinery."""
    B = x.shape[0]
    A = w2.shape[1]
    return pl.pallas_call(
        qnet_kernel,
        out_shape=jax.ShapeDtypeStruct((B, A), out_dtype),
        in_specs=[pl.BlockSpec(memory_space=pltpu.MemorySpace.VMEM)] * 5,
        out_specs=pl.BlockSpec(memory_space=pltpu.MemorySpace.VMEM),
        compiler_params=pltpu.CompilerParams(
            vmem_limit_bytes=32 * 1024 * 1024),  # safe on v7x's 64 MiB VMEM
    )(x, w1, b1, w2, b2)


def _qnet_call_tiled(x, w1, b1, w2, b2, out_dtype, tb):
    """Batch-tiled grid: x / y stream per tile, weights pinned at block (0,0)."""
    Bp, D = x.shape
    H = w1.shape[1]
    A = w2.shape[1]
    grid = (Bp // tb,)
    return pl.pallas_call(
        qnet_kernel,
        out_shape=jax.ShapeDtypeStruct((Bp, A), out_dtype),
        grid_spec=pl.GridSpec(
            grid=grid,
            in_specs=[
                # Unpadded minor dims: last block dim == full array dim.
                pl.BlockSpec((tb, D), lambda i: (i, 0)),   # x: streams
                pl.BlockSpec((D, H), lambda i: (0, 0)),    # w1: resident
                pl.BlockSpec((1, H), lambda i: (0, 0)),    # b1: resident
                pl.BlockSpec((H, A), lambda i: (0, 0)),    # w2: resident
                pl.BlockSpec((1, A), lambda i: (0, 0)),    # b2: resident
            ],
            out_specs=pl.BlockSpec((tb, A), lambda i: (i, 0)),
        ),
        compiler_params=pltpu.CompilerParams(
            dimension_semantics=("parallel",),   # shards batch grid over TCs
            vmem_limit_bytes=32 * 1024 * 1024,   # tiny usage; safe everywhere
        ),
    )(x, w1, b1, w2, b2)


@functools.partial(
    jax.jit, static_argnames=("compute_dtype", "batch_tile", "small_batch_max"))
def q_network_forward(x, w1, b1, w2, b2, *,
                      compute_dtype=jnp.float32,
                      batch_tile=BATCH_TILE,
                      small_batch_max=SMALL_BATCH_MAX):
    """x: (B, obs_dim); w1: (obs_dim, 64); b1: (1, 64) or (64,);
    w2: (64, action_dim); b2: (1, action_dim) or (action_dim,).
    Weights are stored (in_features, out_features), i.e. transposed vs.
    torch.nn.Linear.  Output is f32 with shape (B, action_dim).

    compute_dtype=jnp.bfloat16 enables the bf16 streaming path for the two
    matmuls (f32 accumulation, f32 bias/ReLU).  If x is already stored in
    bf16 by the caller the cast is a no-op and streamed HBM bytes halve.
    """
    B, obs_dim = x.shape
    hidden, action_dim = w2.shape
    assert w1.shape == (obs_dim, hidden)

    out_dtype = jnp.float32

    # Matmul operands in the streaming dtype; biases always f32.
    xc = x.astype(compute_dtype)
    w1c = w1.astype(compute_dtype)
    w2c = w2.astype(compute_dtype)
    b1c = b1.reshape(1, hidden).astype(jnp.float32)
    b2c = b2.reshape(1, action_dim).astype(jnp.float32)

    if B <= small_batch_max:
        return _qnet_call_small(xc, w1c, b1c, w2c, b2c, out_dtype)

    # Large batch: pad ONLY the batch axis (and only when needed) so the grid
    # divides evenly; padded bias-only rows are sliced off below.
    tb = batch_tile
    Bp = _round_up(B, tb)
    if Bp != B:
        xc = jnp.pad(xc, ((0, Bp - B), (0, 0)))
    yp = _qnet_call_tiled(xc, w1c, b1c, w2c, b2c, out_dtype, tb)
    return yp[:B] if Bp != B else yp


def init_params(key, obs_dim, action_dim, hidden=HIDDEN, dtype=jnp.float32):
    """Deterministic init mimicking torch.nn.Linear default
    (U[-1/sqrt(fan_in), 1/sqrt(fan_in)]).  Weights stored (in, out)."""
    k1, k2, k3, k4 = jax.random.split(key, 4)
    bound1 = 1.0 / jnp.sqrt(jnp.array(obs_dim, dtype))
    bound2 = 1.0 / jnp.sqrt(jnp.array(hidden, dtype))
    w1 = jax.random.uniform(k1, (obs_dim, hidden), dtype, -bound1, bound1)
    b1 = jax.random.uniform(k2, (1, hidden), dtype, -bound1, bound1)
    w2 = jax.random.uniform(k3, (hidden, action_dim), dtype, -bound2, bound2)
    b2 = jax.random.uniform(k4, (1, action_dim), dtype, -bound2, bound2)
    return w1, b1, w2, b2


def _ref_forward(x, w1, b1, w2, b2, compute_dtype=jnp.float32):
    """Pure-JAX reference with the same dtype policy as the kernel."""
    h = jnp.dot(x.astype(compute_dtype), w1.astype(compute_dtype),
                preferred_element_type=jnp.float32)
    h = jnp.maximum(h + b1.reshape(1, -1).astype(jnp.float32), 0.0)
    y = jnp.dot(h.astype(compute_dtype), w2.astype(compute_dtype),
                preferred_element_type=jnp.float32)
    return y + b2.reshape(1, -1).astype(jnp.float32)


if __name__ == "__main__":
    key = jax.random.PRNGKey(0)
    obs_dim = 16
    action_dim = 4

    k_params, k_small, k_big = jax.random.split(key, 3)
    w1, b1, w2, b2 = init_params(k_params, obs_dim, action_dim)

    # Path 1: tiny batch (single env step) -> grid-less VMEM-resident call, f32.
    x_small = jax.random.normal(k_small, (8, obs_dim), jnp.float32)
    out_small = q_network_forward(x_small, w1, b1, w2, b2)
    jax.block_until_ready(out_small)
    ref_small = _ref_forward(x_small, w1, b1, w2, b2)
    assert out_small.shape == (8, action_dim)
    assert jnp.allclose(out_small, ref_small, atol=1e-4, rtol=1e-5)

    # Path 2: replay-buffer batch, non-divisible size -> batch-tiled grid
    # (small thresholds/tile forced down so the test stays small).
    x_big = jax.random.normal(k_big, (1000, obs_dim), jnp.float32)
    out_big = q_network_forward(x_big, w1, b1, w2, b2,
                                batch_tile=256, small_batch_max=128)
    jax.block_until_ready(out_big)
    ref_big = _ref_forward(x_big, w1, b1, w2, b2)
    assert out_big.shape == (1000, action_dim)
    assert jnp.allclose(out_big, ref_big, atol=1e-4, rtol=1e-5)

    # Path 3: bf16 streaming path (f32 accumulation), tiled.
    out_bf16 = q_network_forward(x_big, w1, b1, w2, b2,
                                 compute_dtype=jnp.bfloat16,
                                 batch_tile=256, small_batch_max=128)
    jax.block_until_ready(out_bf16)
    ref_bf16 = _ref_forward(x_big, w1, b1, w2, b2, compute_dtype=jnp.bfloat16)
    assert out_bf16.shape == (1000, action_dim)
    assert jnp.allclose(out_bf16, ref_bf16, atol=2e-3, rtol=2e-3)

    print("KERNEL_OK")
</pallas_src>

<mosaic_0001>
module attributes {stable_mosaic.version = 11 : i64} {
  func.func @qnet_kernel(%arg0: memref<8x16xf32, #tpu.memory_space<vmem>>, %arg1: memref<16x64xf32, #tpu.memory_space<vmem>>, %arg2: memref<1x64xf32, #tpu.memory_space<vmem>>, %arg3: memref<64x4xf32, #tpu.memory_space<vmem>>, %arg4: memref<1x4xf32, #tpu.memory_space<vmem>>, %arg5: memref<8x4xf32, #tpu.memory_space<vmem>>) attributes {dimension_semantics = [], scalar_prefetch = 0 : i64, scratch_operands = 0 : i64, tpu.core_type = #tpu.core_type<tc>} {
    %c0 = arith.constant 0 : index
    %c0_0 = arith.constant 0 : index
    %0 = vector.load %arg0[%c0, %c0_0] : memref<8x16xf32, #tpu.memory_space<vmem>>, vector<8x16xf32>
    %c0_1 = arith.constant 0 : index
    %c0_2 = arith.constant 0 : index
    %1 = vector.load %arg1[%c0_1, %c0_2] : memref<16x64xf32, #tpu.memory_space<vmem>>, vector<16x64xf32>
    %cst = arith.constant dense<0.000000e+00> : vector<8x64xf32>
    %2 = tpu.matmul %0, %1, %cst {dimension_numbers = #tpu.dot_dimension_numbers<[1], [0], [0], [1], [0, 0, 1, 1], [], []>} : vector<8x16xf32>, vector<16x64xf32>, vector<8x64xf32> -> vector<8x64xf32>
    %c0_3 = arith.constant 0 : index
    %c0_4 = arith.constant 0 : index
    %3 = vector.load %arg2[%c0_3, %c0_4] : memref<1x64xf32, #tpu.memory_space<vmem>>, vector<1x64xf32>
    %4 = vector.broadcast %3 : vector<1x64xf32> to vector<8x64xf32>
    %5 = arith.addf %2, %4 : vector<8x64xf32>
    %cst_5 = arith.constant 0.000000e+00 : f32
    %6 = vector.broadcast %cst_5 : f32 to vector<8x64xf32>
    %7 = arith.maximumf %5, %6 : vector<8x64xf32>
    %c0_6 = arith.constant 0 : index
    %c0_7 = arith.constant 0 : index
    %8 = vector.load %arg3[%c0_6, %c0_7] : memref<64x4xf32, #tpu.memory_space<vmem>>, vector<64x4xf32>
    %cst_8 = arith.constant dense<0.000000e+00> : vector<8x4xf32>
    %9 = tpu.matmul %7, %8, %cst_8 {dimension_numbers = #tpu.dot_dimension_numbers<[1], [0], [0], [1], [0, 0, 1, 1], [], []>} : vector<8x64xf32>, vector<64x4xf32>, vector<8x4xf32> -> vector<8x4xf32>
    %c0_9 = arith.constant 0 : index
    %c0_10 = arith.constant 0 : index
    %10 = vector.load %arg4[%c0_9, %c0_10] : memref<1x4xf32, #tpu.memory_space<vmem>>, vector<1x4xf32>
    %11 = vector.broadcast %10 : vector<1x4xf32> to vector<8x4xf32>
    %12 = arith.addf %9, %11 : vector<8x4xf32>
    %c0_11 = arith.constant 0 : index
    %c0_12 = arith.constant 0 : index
    %13 = vector.load %arg5[%c0_11, %c0_12] : memref<8x4xf32, #tpu.memory_space<vmem>>, vector<8x4xf32>
    tpu.vector_store %arg5[%c0_11, %c0_12], %12 {strides = array<i32>} : memref<8x4xf32, #tpu.memory_space<vmem>>, vector<8x4xf32>,
    return
  }
}

</mosaic_0001>

<llo_original>
// kernel: q_network_forward.1
$region0: #{q_network_forward.1}
  #allocation0 [shape = 'u32[]', space=smem, size = 0x4, offset = 0x4, fixed_abs, tag = 'smem constant byte address 0x4 - core index']
  #allocation1 [shape = 'u32[72,128]{1,0:T(1,128)}', space=vmem, size = 0x9000, scoped, tag = 'internal scratch']
  %s0 = inlined_call_operand.vmem [shape: f32[8,16], index: 0, kind: input, shape index: {}]
  %s1 = inlined_call_operand.vmem [shape: f32[16,64], index: 1, kind: input, shape index: {}]
  %s2 = inlined_call_operand.vmem [shape: f32[1,64], index: 2, kind: input, shape index: {}]
  %s3 = inlined_call_operand.vmem [shape: f32[64,4], index: 3, kind: input, shape index: {}]
  %s4 = inlined_call_operand.vmem [shape: f32[1,4], index: 4, kind: input, shape index: {}]
  %s5 = inlined_call_operand.vmem [shape: f32[8,4], index: 5, kind: output, shape index: {}]
  %s6 = sld [smem:[#allocation0]]
  $region30: #{q_network_forward.1} parent=0
    _
  %s8 = ssub.s32 1, %s6
  %s9 = scalar_select 0, %s8, %s6
  // Predicated region
  $region2: #{q_network_forward.1} parent=0 // pred_check
    _
  $region3: #{q_network_forward.1} parent=0 // pred_check_branch
    %11 = sbr.rel (0) target = $region5
  $region4: #{q_network_forward.1} parent=0 // pred_region
    _
  $region5: #{q_network_forward.1} parent=0 // pred_fallthru
    _
  // Predicated region
  $region6: #{q_network_forward.1} parent=0 // pred_check
    _
  $region7: #{q_network_forward.1} parent=0 // pred_check_branch
    %13 = sbr.rel (0) target = $region9
  $region8: #{q_network_forward.1} parent=0 // pred_region
    _
  $region9: #{q_network_forward.1} parent=0 // pred_fallthru
    _
  // Predicated region
  $region10: #{q_network_forward.1} parent=0 // pred_check
    _
  $region11: #{q_network_forward.1} parent=0 // pred_check_branch
    %15 = sbr.rel (0) target = $region13
  $region12: #{q_network_forward.1} parent=0 // pred_region
    _
  $region13: #{q_network_forward.1} parent=0 // pred_fallthru
    _
  // Predicated region
  $region14: #{q_network_forward.1} parent=0 // pred_check
    _
  $region15: #{q_network_forward.1} parent=0 // pred_check_branch
    %17 = sbr.rel (0) target = $region17
  $region16: #{q_network_forward.1} parent=0 // pred_region
    _
  $region17: #{q_network_forward.1} parent=0 // pred_fallthru
    _
  // Predicated region
  $region18: #{q_network_forward.1} parent=0 // pred_check
    _
  $region19: #{q_network_forward.1} parent=0 // pred_check_branch
    %19 = sbr.rel (0) target = $region21
  $region20: #{q_network_forward.1} parent=0 // pred_region
    _
  $region21: #{q_network_forward.1} parent=0 // pred_fallthru
    _
  %v20 = vld [vmem:[%s0] sm:$0xff]
  %v21 = vld [vmem:[%s1] sm:$0xff]
  %v22 = vld [vmem:[%s1 + $0x8] sm:$0xff]
  %v23 = vld [vmem:[%s2] sm:$0x1]
  %v25 = vperm.slane %v23, 0
  %vm27 = vcmask 130048
  %v29 = vsel %vm27, %v20, 0
  %31 = vmatpush.msra.mxu0 0.0
  %32 = vmatpush.msra.mxu0 0.0
  %33 = vmatpush.msra.mxu0 0.0
  %34 = vmatpush.msra.mxu0 0.0
  %35 = vmatpush.msra.mxu0 0.0
  %36 = vmatpush.msra.mxu0 0.0
  %37 = vmatpush.msra.mxu0 0.0
  %38 = vmatpush.msra.mxu0 0.0
  %39 = vmatpush.msra.mxu0 0.0
  %40 = vmatpush.msra.mxu0 0.0
  %41 = vmatpush.msra.mxu0 0.0
  %42 = vmatpush.msra.mxu0 0.0
  %43 = vmatpush.msra.mxu0 0.0
  %44 = vmatpush.msra.mxu0 0.0
  %45 = vmatpush.msra.mxu0 %v22
  %46 = vmatpush.msra.mxu0 %v21
  %47 = vmatmul.f32.gmra.mxu0 %v29
  %v48 = vpop.f32.mrf.mxu0
  %v49 = vadd.f32 %v25, %v48
  %50 = vdwg.mxu0
  %v51 = vmax.f32 %v49, 0.0
  %v52 = vld [vmem:[%s3] sm:$0xff]
  %v53 = vld [vmem:[%s3 + $0x8] sm:$0xff]
  %v54 = vld [vmem:[%s3 + $0x10] sm:$0xff]
  %v55 = vld [vmem:[%s3 + $0x18] sm:$0xff]
  %v56 = vld [vmem:[%s3 + $0x20] sm:$0xff]
  %v57 = vld [vmem:[%s3 + $0x28] sm:$0xff]
  %v58 = vld [vmem:[%s3 + $0x30] sm:$0xff]
  %v59 = vld [vmem:[%s3 + $0x38] sm:$0xff]
  %v60 = vld [vmem:[%s4] sm:$0x1]
  %v62 = vperm.slane %v60, 0
  %vm64 = vcmask 523264
  %v66 = vsel %vm64, %v51, 0
  %68 = vmatpush.msra.mxu0 0.0
  %69 = vmatpush.msra.mxu0 0.0
  %70 = vmatpush.msra.mxu0 0.0
  %71 = vmatpush.msra.mxu0 0.0
  %72 = vmatpush.msra.mxu0 0.0
  %73 = vmatpush.msra.mxu0 0.0
  %74 = vmatpush.msra.mxu0 0.0
  %75 = vmatpush.msra.mxu0 0.0
  %76 = vmatpush.msra.mxu0 %v59
  %77 = vmatpush.msra.mxu0 %v58
  %78 = vmatpush.msra.mxu0 %v57
  %79 = vmatpush.msra.mxu0 %v56
  %80 = vmatpush.msra.mxu0 %v55
  %81 = vmatpush.msra.mxu0 %v54
  %82 = vmatpush.msra.mxu0 %v53
  %83 = vmatpush.msra.mxu0 %v52
  %84 = vmatmul.f32.gmra.mxu0 %v66
  %v85 = vpop.f32.mrf.mxu0
  %v86 = vadd.f32 %v62, %v85
  %87 = vdwg.mxu0
  %vm88 = vcmask 31744
  %89 = vst.msk [vmem:[%s5] sm:$0xff] %vm88, %v86
  // Predicated region
  $region22: #{q_network_forward.1} parent=0 // pred_check
    _
  $region23: #{q_network_forward.1} parent=0 // pred_check_branch
    %91 = sbr.rel (0) target = $region25
  $region24: #{q_network_forward.1} parent=0 // pred_region
    _
  $region25: #{q_network_forward.1} parent=0 // pred_fallthru
    _
  // Predicated region
  $region26: #{q_network_forward.1} parent=0 // pred_check
    _
  $region27: #{q_network_forward.1} parent=0 // pred_check_branch
    %93 = sbr.rel (0) target = $region29
  $region28: #{q_network_forward.1} parent=0 // pred_region
    _
  $region29: #{q_network_forward.1} parent=0 // pred_fallthru
    _

</llo_original>
